<compile_context>
chip_gen: v7x
topology: tpu7x:2x2x1
jax: 0.10.0
libtpu: 0.0.40
codegen_flags: <defaults>
</compile_context>

<pallas_src>
import math

import jax
import jax.numpy as jnp
from jax.experimental import pallas as pl
from jax.experimental.pallas import tpu as pltpu

_LANE = 128
_SMALL_TOTAL = 16 * 1024          # single-block fast path threshold (elements)

_BUDGET_CACHE = None


def _budgets():
    """(per-operand tile bytes, vmem_limit_bytes), tuned per TPU generation."""
    global _BUDGET_CACHE
    if _BUDGET_CACHE is None:
        tile, limit = 4 * 1024 * 1024, 40 * 1024 * 1024   # safe everywhere
        try:
            info = pltpu.get_tpu_info()
            vmem = int(getattr(info, "vmem_capacity_bytes", 0) or 0)
            if vmem >= 96 * 1024 * 1024:
                # v5e / v6e: 128 MiB physical VMEM -> big tiles, small step tax
                tile, limit = 8 * 1024 * 1024, 64 * 1024 * 1024
            elif vmem > 0:
                # v7x: 64 MiB physical VMEM per TensorCore -> stay modest
                tile, limit = 4 * 1024 * 1024, 48 * 1024 * 1024
        except Exception:
            pass
        _BUDGET_CACHE = (tile, limit)
    return _BUDGET_CACHE


# ----------------------------------------------------------------------------
# kernels
# ----------------------------------------------------------------------------
def _mul_kernel(a_ref, b_ref, o_ref):
    o_ref[...] = a_ref[...].astype(o_ref.dtype) * b_ref[...].astype(o_ref.dtype)


def _mul_scalar_kernel(x_ref, s_ref, o_ref):
    # s_ref lives in SMEM: one scalar broadcast in-kernel; no full-size
    # broadcasted second operand is ever read from HBM.
    o_ref[...] = (x_ref[...] * s_ref[0]).astype(o_ref.dtype)


def _mul_rowscale_kernel(x_ref, s_ref, o_ref):
    # x_ref: (tile_rows, tile_k); s_ref: (tile_rows, 1) per-row scale broadcast
    # across lanes in-kernel (per-channel scale for NCHW inputs).
    o_ref[...] = x_ref[...].astype(o_ref.dtype) * s_ref[...].astype(o_ref.dtype)


# ----------------------------------------------------------------------------
# planning helpers
# ----------------------------------------------------------------------------
def _round_up(n, m):
    return -(-n // m) * m


def _sublane_multiple(*dtypes):
    """Sublane granularity: 8 for 32-bit, 16 for 16-bit, 32 for 8-bit dtypes."""
    min_item = min(jnp.dtype(d).itemsize for d in dtypes)
    min_item = max(1, min(4, min_item))
    return 8 * (4 // min_item)


def _plan_flat(total, sub):
    """Pick (width, rows, tail) for a flat buffer of `total` elements.

    Prefer the widest lane-dense width (multiple of 128) that divides `total`
    and leaves >= sub rows.  If nothing divides (ragged count), the main slab
    covers the largest lane-aligned prefix and `tail` elements are handled by a
    tiny separate call -- never a full-array jnp.pad copy.
    """
    divisors = [c for c in (2048, 1024, 512, 256, _LANE) if total % c == 0]
    good = [c for c in divisors if total // c >= sub]
    if good:
        w = good[0]
    elif divisors:
        w = divisors[0]
    else:
        w = 512
    main = (total // w) * w
    return w, main // w, total - main


def _tile_rows_for(rows, width, itemsize, sub, target_bytes):
    """Rows per tile targeting ~target_bytes per operand, >= 2 grid steps."""
    if rows <= sub:
        return rows
    tr = max(sub, (target_bytes // (width * itemsize)) // sub * sub)
    if rows >= 2 * sub:
        # keep at least two grid steps so v7x's two TensorCores both get work
        tr = min(tr, _round_up((rows + 1) // 2, sub))
    tr = min(tr, (rows // sub) * sub)
    return max(tr, sub)


def _compiler_params(n_axes):
    _, limit = _budgets()
    return pltpu.CompilerParams(
        dimension_semantics=("parallel",) * n_axes,
        vmem_limit_bytes=limit,
    )


def _vmem_only_params():
    _, limit = _budgets()
    return pltpu.CompilerParams(vmem_limit_bytes=limit)


# ----------------------------------------------------------------------------
# execution paths
# ----------------------------------------------------------------------------
def _single_block_mul(a_f, b_f, total, out_dtype):
    """Whole problem in one VMEM block, >= 8 sublanes for dense vregs."""
    sub = _sublane_multiple(a_f.dtype, b_f.dtype, out_dtype)
    width = -(-total // sub)
    padded = width * sub
    if padded != total:   # tiny pad only (input is small / a ragged tail)
        a_f = jnp.pad(a_f, (0, padded - total))
        b_f = jnp.pad(b_f, (0, padded - total))
    out2 = pl.pallas_call(
        _mul_kernel,
        out_shape=jax.ShapeDtypeStruct((sub, width), out_dtype),
        compiler_params=_vmem_only_params(),
    )(a_f.reshape(sub, width), b_f.reshape(sub, width))
    out_flat = out2.reshape(-1)
    return out_flat[:total] if padded != total else out_flat


def _general_2d(a_full, b_full, out_dtype, total):
    """Multiply two same-shape operands, tiled over a lane-dense 2-D slab."""
    if total <= _SMALL_TOTAL:
        return _single_block_mul(a_full.reshape(-1), b_full.reshape(-1),
                                 total, out_dtype)

    target, _ = _budgets()
    sub = _sublane_multiple(a_full.dtype, b_full.dtype, out_dtype)
    width, rows, tail = _plan_flat(total, sub)
    main = rows * width
    itemsize = max(jnp.dtype(out_dtype).itemsize,
                   jnp.dtype(a_full.dtype).itemsize,
                   jnp.dtype(b_full.dtype).itemsize)
    tile_rows = _tile_rows_for(rows, width, itemsize, sub, target)

    a_f = a_full.reshape(-1)
    b_f = b_full.reshape(-1)
    a2 = (a_f if tail == 0 else a_f[:main]).reshape(rows, width)
    b2 = (b_f if tail == 0 else b_f[:main]).reshape(rows, width)

    out2 = pl.pallas_call(
        _mul_kernel,
        out_shape=jax.ShapeDtypeStruct((rows, width), out_dtype),
        grid_spec=pltpu.PrefetchScalarGridSpec(
            num_scalar_prefetch=0,
            grid=(pl.cdiv(rows, tile_rows),),
            in_specs=[
                pl.BlockSpec((tile_rows, width), lambda i: (i, 0)),
                pl.BlockSpec((tile_rows, width), lambda i: (i, 0)),
            ],
            out_specs=pl.BlockSpec((tile_rows, width), lambda i: (i, 0)),
        ),
        compiler_params=_compiler_params(1),
    )(a2, b2)

    out_flat = out2.reshape(-1)
    if tail:
        # rare: element count not a multiple of 128 -> tiny single-block tail
        out_tail = _single_block_mul(a_f[main:], b_f[main:], tail, out_dtype)
        out_flat = jnp.concatenate([out_flat, out_tail])
    return out_flat


def _scalar_path(x, s, out_dtype):
    """tensor * scalar: scalar lives in SMEM, broadcast in-kernel."""
    total = x.size
    target, _ = _budgets()
    sub = _sublane_multiple(x.dtype, out_dtype)
    width, rows, tail = _plan_flat(total, sub)
    main = rows * width
    itemsize = max(jnp.dtype(out_dtype).itemsize, jnp.dtype(x.dtype).itemsize)
    tile_rows = _tile_rows_for(rows, width, itemsize, sub, target)

    x_f = x.reshape(-1)
    x2 = (x_f if tail == 0 else x_f[:main]).reshape(rows, width)

    s_dt = jnp.float32 if jnp.issubdtype(out_dtype, jnp.floating) else jnp.int32
    s1 = jnp.asarray(s).reshape(-1)[:1].astype(s_dt)   # shape (1,) -> SMEM

    out2 = pl.pallas_call(
        _mul_scalar_kernel,
        out_shape=jax.ShapeDtypeStruct((rows, width), out_dtype),
        grid_spec=pltpu.PrefetchScalarGridSpec(
            num_scalar_prefetch=0,
            grid=(pl.cdiv(rows, tile_rows),),
            in_specs=[
                pl.BlockSpec((tile_rows, width), lambda i: (i, 0)),
                pl.BlockSpec(memory_space=pltpu.MemorySpace.SMEM),
            ],
            out_specs=pl.BlockSpec((tile_rows, width), lambda i: (i, 0)),
        ),
        compiler_params=_compiler_params(1),
    )(x2, s1)

    out_flat = out2.reshape(-1)
    if tail:
        out_tail = _single_block_mul(x_f[main:], jnp.broadcast_to(s1, (tail,)),
                                     tail, out_dtype)
        out_flat = jnp.concatenate([out_flat, out_tail])
    return out_flat


def _rowscale_split(big_shape, small_shape):
    """If `small` broadcasts against `big` as a pure leading-axes scale (all
    non-1 dims of `small` sit before some split point j, everything after j is
    1), return (padded_small_shape, j, R, K) with big viewed as (R, K)."""
    nd = len(big_shape)
    padded = (1,) * (nd - len(small_shape)) + tuple(small_shape)
    non1 = [ax for ax, d in enumerate(padded) if d != 1]
    if not non1:
        return None
    j = non1[-1] + 1
    r = math.prod(big_shape[:j]) if j > 0 else 1
    k = math.prod(big_shape[j:]) if j < nd else 1
    return padded, j, r, k


def _rowscale_path(x, s, padded_s_shape, j, r, k, out_dtype):
    """tensor * per-channel-style scale: big operand viewed as (R, K), scale
    expanded only to a tiny (R, 1) column; K tiled on a second lane-dense
    ("parallel") grid axis so large feature maps pipeline and both v7x cores
    get work -- the full-size broadcast is never materialized in HBM."""
    target, _ = _budgets()
    sub = _sublane_multiple(x.dtype, s.dtype, out_dtype)
    itemsize = max(jnp.dtype(out_dtype).itemsize, jnp.dtype(x.dtype).itemsize)

    tile_k = min(k, 2048)                       # k % 128 == 0 guaranteed
    tile_rows = _tile_rows_for(r, tile_k, itemsize, sub, target)

    x2 = x.reshape(r, k)
    scale_rows = jnp.broadcast_to(
        s.reshape(padded_s_shape[:j]), x.shape[:j]).reshape(r, 1)

    grid = (pl.cdiv(r, tile_rows), pl.cdiv(k, tile_k))
    out2 = pl.pallas_call(
        _mul_rowscale_kernel,
        out_shape=jax.ShapeDtypeStruct((r, k), out_dtype),
        grid_spec=pltpu.PrefetchScalarGridSpec(
            num_scalar_prefetch=0,
            grid=grid,
            in_specs=[
                pl.BlockSpec((tile_rows, tile_k), lambda i, jj: (i, jj)),
                pl.BlockSpec((tile_rows, 1), lambda i, jj: (i, 0)),
            ],
            out_specs=pl.BlockSpec((tile_rows, tile_k), lambda i, jj: (i, jj)),
        ),
        compiler_params=_compiler_params(2),
    )(x2, scale_rows)
    return out2.reshape(-1)


# ----------------------------------------------------------------------------
# public wrapper (torch.mul semantics)
# ----------------------------------------------------------------------------
def pallas_mul(a, b):
    """torch.mul(a, b): broadcasting elementwise multiply, Pallas-TPU backed."""
    a = jnp.asarray(a)
    b = jnp.asarray(b)
    out_dtype = jnp.promote_types(a.dtype, b.dtype)
    out_shape = jnp.broadcast_shapes(a.shape, b.shape)
    total = math.prod(out_shape) if out_shape else 1

    if total == 0:
        return jnp.zeros(out_shape, out_dtype)

    is_small = total <= _SMALL_TOTAL
    narrow = (jnp.dtype(out_dtype).itemsize <= 4
              and not jnp.issubdtype(out_dtype, jnp.complexfloating))

    if not is_small and narrow:
        # --- tensor x scalar: no full-size broadcast in HBM ------------------
        # (64-bit scalars under jax x64 fall through to the general path so the
        #  SMEM 32-bit scalar never silently truncates the value.)
        if (b.size == 1 and tuple(a.shape) == out_shape
                and jnp.dtype(b.dtype).itemsize <= 4):
            return _scalar_path(a, b, out_dtype).reshape(out_shape)
        if (a.size == 1 and tuple(b.shape) == out_shape
                and jnp.dtype(a.dtype).itemsize <= 4):
            return _scalar_path(b, a, out_dtype).reshape(out_shape)

        # --- tensor x per-channel / leading-axes scale ------------------------
        for big, small_op in ((a, b), (b, a)):
            if tuple(big.shape) != out_shape or tuple(small_op.shape) == out_shape:
                continue
            split = _rowscale_split(big.shape, small_op.shape)
            if split is None:
                continue
            padded, j, r, k = split
            # lane-aligned K only: misaligned K would lower to masked partial
            # stores, so fall back to the lane-dense general path instead.
            if k >= _LANE and k % _LANE == 0:
                return _rowscale_path(big, small_op, padded, j, r, k,
                                      out_dtype).reshape(out_shape)

    # --- general case: same-shape (free reshape) or materialized broadcast ---
    # TODO(synk): arbitrary multi-axis broadcast patterns (neither scalar nor a
    # leading-axes scale with 128-aligned K) still materialize the broadcast
    # before the kernel.
    a_full = a if tuple(a.shape) == out_shape else jnp.broadcast_to(a, out_shape)
    b_full = b if tuple(b.shape) == out_shape else jnp.broadcast_to(b, out_shape)
    return _general_2d(a_full, b_full, out_dtype, total).reshape(out_shape)


class Mul:
    """Pallas-backed equivalent of torchpruner's Mul FunctionModule."""

    def forward(self, input, other):
        # TODO(synk): torch.mul's `out=` kwarg (in-place destination) has no
        # functional JAX equivalent and is not supported.
        return pallas_mul(input, other)

    __call__ = forward


# ----------------------------------------------------------------------------
# demo / self-test
# ----------------------------------------------------------------------------
if __name__ == "__main__":
    key = jax.random.PRNGKey(0)
    k1, k2, k3, k4, k5, k6, k7, k8 = jax.random.split(key, 8)
    mul = Mul()

    # 1) NCHW tensor-tensor multiply (small -> single-block fast path)
    x = jax.random.normal(k1, (2, 4, 16, 16), dtype=jnp.float32)
    y = jax.random.normal(k2, (2, 4, 16, 16), dtype=jnp.float32)
    out = jax.block_until_ready(mul(x, y))
    assert out.shape == (2, 4, 16, 16)
    assert jnp.allclose(out, x * y, atol=1e-6)

    # 2) broadcasting: per-channel scale (1, C, 1, 1), small
    scale = jax.random.normal(k3, (1, 4, 1, 1), dtype=jnp.float32)
    out_b = jax.block_until_ready(mul(x, scale))
    assert out_b.shape == (2, 4, 16, 16)
    assert jnp.allclose(out_b, x * scale, atol=1e-6)

    # 3) scalar multiply (small)
    out_s = jax.block_until_ready(mul(x, jnp.float32(2.5)))
    assert jnp.allclose(out_s, x * 2.5, atol=1e-6)

    # 4) larger same-shape multiply: lane-dense slab, multi-step pipelined grid
    xl = jax.random.normal(k4, (8, 16, 64, 128), dtype=jnp.float32)
    yl = jax.random.normal(k5, (8, 16, 64, 128), dtype=jnp.float32)
    out_l = jax.block_until_ready(mul(xl, yl))
    assert jnp.allclose(out_l, xl * yl, atol=1e-6)

    # 5) larger per-channel scale -> in-kernel row-broadcast path with a tiled
    #    K grid axis (no HBM-size broadcast of the scale)
    scale_l = jax.random.normal(k6, (1, 16, 1, 1), dtype=jnp.float32)
    out_lc = jax.block_until_ready(mul(xl, scale_l))
    assert jnp.allclose(out_lc, xl * scale_l, atol=1e-6)

    # 6) larger scalar multiply -> SMEM-scalar path
    out_ls = jax.block_until_ready(mul(xl, jnp.float32(-0.75)))
    assert jnp.allclose(out_ls, xl * (-0.75), atol=1e-6)

    # 7) small ragged shape (element count not a multiple of 128)
    xr = jax.random.normal(k1, (3, 5, 7, 11), dtype=jnp.float32)
    yr = jax.random.normal(k2, (3, 5, 7, 11), dtype=jnp.float32)
    out_r = jax.block_until_ready(mul(xr, yr))
    assert jnp.allclose(out_r, xr * yr, atol=1e-6)

    # 8) large ragged element count -> lane-aligned prefix + tiny tail (no pad)
    xrl = jax.random.normal(k7, (33, 1000), dtype=jnp.float32)
    yrl = jax.random.normal(k8, (33, 1000), dtype=jnp.float32)
    out_rl = jax.block_until_ready(mul(xrl, yrl))
    assert jnp.allclose(out_rl, xrl * yrl, atol=1e-6)

    # 9) per-channel scale with K not 128-aligned -> lane-dense general fallback
    xm = jax.random.normal(k7, (4, 8, 30, 30), dtype=jnp.float32)
    scale_m = jax.random.normal(k8, (1, 8, 1, 1), dtype=jnp.float32)
    out_m = jax.block_until_ready(mul(xm, scale_m))
    assert jnp.allclose(out_m, xm * scale_m, atol=1e-6)

    print("KERNEL_OK")
</pallas_src>

<mosaic_0001>
module attributes {stable_mosaic.version = 11 : i64} {
  func.func @_mul_kernel(%arg0: memref<8x256xf32, #tpu.memory_space<vmem>>, %arg1: memref<8x256xf32, #tpu.memory_space<vmem>>, %arg2: memref<8x256xf32, #tpu.memory_space<vmem>>) attributes {dimension_semantics = [], scalar_prefetch = 0 : i64, scratch_operands = 0 : i64, tpu.core_type = #tpu.core_type<tc>} {
    %c0 = arith.constant 0 : index
    %c0_0 = arith.constant 0 : index
    %0 = vector.load %arg0[%c0, %c0_0] : memref<8x256xf32, #tpu.memory_space<vmem>>, vector<8x256xf32>
    %c0_1 = arith.constant 0 : index
    %c0_2 = arith.constant 0 : index
    %1 = vector.load %arg1[%c0_1, %c0_2] : memref<8x256xf32, #tpu.memory_space<vmem>>, vector<8x256xf32>
    %2 = arith.mulf %0, %1 : vector<8x256xf32>
    %c0_3 = arith.constant 0 : index
    %c0_4 = arith.constant 0 : index
    %3 = vector.load %arg2[%c0_3, %c0_4] : memref<8x256xf32, #tpu.memory_space<vmem>>, vector<8x256xf32>
    tpu.vector_store %arg2[%c0_3, %c0_4], %2 {strides = array<i32>} : memref<8x256xf32, #tpu.memory_space<vmem>>, vector<8x256xf32>,
    return
  }
}

</mosaic_0001>

<llo_original>
// kernel: tpu_custom_call.1
$region0: #{tpu_custom_call.1}
  #allocation0 [shape = 'u32[]', space=smem, size = 0x4, offset = 0x4, fixed_abs, tag = 'smem constant byte address 0x4 - core index']
  #allocation1 [shape = 'u32[144,128]{1,0:T(1,128)}', space=vmem, size = 0x12000, scoped, tag = 'internal scratch']
  %s0 = inlined_call_operand.hbm [shape: f32[8,256], index: 0, kind: input, shape index: {}]
  %s1 = inlined_call_operand.hbm [shape: f32[8,256], index: 1, kind: input, shape index: {}]
  %s2 = inlined_call_operand.hbm [shape: f32[8,256], index: 2, kind: output, shape index: {}]
  %s3 = sld [smem:[#allocation0]]
  $region26: #{tpu_custom_call.1} parent=0
    _
  %s5 = ssub.s32 1, %s3
  %s6 = scalar_select 0, %s5, %s3
  $region1: #{tpu_custom_call.1} parent=0
    #allocation2 [shape = 'u8[8192]{0}', space=vmem, size = 0x2000, scoped, tag = 'input window, operand 0, single buffered']
    #allocation3 [shape = 's32[1]{0}', space=sflag, size = 0x4, scoped, tag = 'scoped memory for tpu_custom_call.1']
    #allocation4 [shape = 's32[1]{0}', space=sflag, size = 0x4, scoped, tag = 'scoped memory for tpu_custom_call.1']
    #allocation5 [shape = 'u8[8192]{0}', space=vmem, size = 0x2000, scoped, tag = 'input window, operand 1, single buffered']
    #allocation6 [shape = 's32[1]{0}', space=sflag, size = 0x4, scoped, tag = 'scoped memory for tpu_custom_call.1']
    #allocation7 [shape = 'u8[8192]{0}', space=vmem, size = 0x2000, scoped, tag = 'output window, operand 0, single buffered']
    %7 = vsyncpa [#allocation3], 0
    %8 = vsyncpa [#allocation6], 0
    %9 = vsyncpa [#allocation4], 0
    // Predicated region
    $region2: #{tpu_custom_call.1} parent=1 // pred_check
      _
    $region3: #{tpu_custom_call.1} parent=1 // pred_check_branch
      %11 = sbr.rel (0) target = $region5
    $region4: #{tpu_custom_call.1} parent=1 // pred_region
      %s13 = ssub.s32 256, 256
      %14 = vsyncadd [#allocation3], %s13
      %s16 = sshll.u32 [#allocation2], 4
      %s17 = int_to_ptr.vmem [resolvable:$true] %s16
      %19 = dma.hbm_to_vmem [thread:$0]  %s0, 256, %s17, [#allocation3]
    $region5: #{tpu_custom_call.1} parent=1 // pred_fallthru
      _
    // Predicated region
    $region6: #{tpu_custom_call.1} parent=1 // pred_check
      _
    $region7: #{tpu_custom_call.1} parent=1 // pred_check_branch
      %21 = sbr.rel (0) target = $region9
    $region8: #{tpu_custom_call.1} parent=1 // pred_region
      %s23 = ssub.s32 256, 256
      %24 = vsyncadd [#allocation6], %s23
      %s26 = sshll.u32 [#allocation5], 4
      %s27 = int_to_ptr.vmem [resolvable:$true] %s26
      %29 = dma.hbm_to_vmem [thread:$0]  %s1, 256, %s27, [#allocation6]
    $region9: #{tpu_custom_call.1} parent=1 // pred_fallthru
      _
    // Predicated region
    $region10: #{tpu_custom_call.1} parent=1 // pred_check
      _
    $region11: #{tpu_custom_call.1} parent=1 // pred_check_branch
      %31 = sbr.rel (0) target = $region13
    $region12: #{tpu_custom_call.1} parent=1 // pred_region
      %32 = dma.done [#allocation3], 256
    $region13: #{tpu_custom_call.1} parent=1 // pred_fallthru
      _
    // Predicated region
    $region14: #{tpu_custom_call.1} parent=1 // pred_check
      _
    $region15: #{tpu_custom_call.1} parent=1 // pred_check_branch
      %34 = sbr.rel (0) target = $region17
    $region16: #{tpu_custom_call.1} parent=1 // pred_region
      %35 = dma.done [#allocation6], 256
    $region17: #{tpu_custom_call.1} parent=1 // pred_fallthru
      _
    %v36 = vld [vmem:[#allocation2] sm:$0xff]
    %v37 = vld [vmem:[#allocation2 + $0x8] sm:$0xff]
    %v38 = vld [vmem:[#allocation5] sm:$0xff]
    %v39 = vld [vmem:[#allocation5 + $0x8] sm:$0xff]
    %v40 = vmul.f32 %v36, %v38
    %v41 = vmul.f32 %v37, %v39
    %42 = vst [vmem:[#allocation7] sm:$0xff] %v40
    %43 = vst [vmem:[#allocation7 + $0x8] sm:$0xff] %v41
    // Predicated region
    $region18: #{tpu_custom_call.1} parent=1 // pred_check
      _
    $region19: #{tpu_custom_call.1} parent=1 // pred_check_branch
      %45 = sbr.rel (0) target = $region21
    $region20: #{tpu_custom_call.1} parent=1 // pred_region
      %s47 = ssub.s32 256, 256
      %48 = vsyncadd [#allocation4], %s47
      %s50 = sshll.u32 [#allocation7], 4
      %s51 = int_to_ptr.vmem [resolvable:$true] %s50
      %53 = dma.vmem_to_hbm [thread:$0]  %s51, 256, %s2, [#allocation4]
    $region21: #{tpu_custom_call.1} parent=1 // pred_fallthru
      _
    // Predicated region
    $region22: #{tpu_custom_call.1} parent=1 // pred_check
      _
    $region23: #{tpu_custom_call.1} parent=1 // pred_check_branch
      %55 = sbr.rel (0) target = $region25
    $region24: #{tpu_custom_call.1} parent=1 // pred_region
      %56 = dma.done [#allocation4], 256
    $region25: #{tpu_custom_call.1} parent=1 // pred_fallthru
      _
    %57 = vsyncpa [#allocation3], 1
    %58 = vsyncpa [#allocation6], 1
    %59 = vsyncpa [#allocation4], 1

</llo_original>
